<compile_context>
chip_gen: v7x
topology: tpu7x:2x2x1
jax: 0.10.0
libtpu: 0.0.40
codegen_flags: <defaults>
</compile_context>

<pallas_src>
import functools

import jax
import jax.numpy as jnp
from jax.experimental import pallas as pl
from jax.experimental.pallas import tpu as pltpu


def _round_up(x: int, m: int) -> int:
    return ((x + m - 1) // m) * m


def _gather_rows_kernel(ids_ref, table_hbm, out_ref, buf_ref, sem_ref, *, tm):
    """Gather `tm` embedding rows for one output tile via per-row DMAs.

    ids_ref:   SMEM (R_pad,) int32      flattened token ids (scalar prefetch)
    table_hbm: HBM  (V, F)              full embedding table (left in HBM)
    out_ref:   VMEM (tm, F)             output tile (full feature dim per tile)
    buf_ref:   VMEM (tm, F)             DMA landing buffer
    sem_ref:   DMA semaphores, shape (tm,)
    """
    base = pl.program_id(0) * tm

    # Issue all row DMAs for this tile (kept in flight together).
    @pl.loop(0, tm)
    def _(r):
        row = ids_ref[base + r]
        pltpu.make_async_copy(
            table_hbm.at[pl.ds(row, 1)],   # (1, F) row in HBM
            buf_ref.at[pl.ds(r, 1)],       # (1, F) row in VMEM
            sem_ref.at[r],
        ).start()

    # Wait for every row DMA (src of the wait descriptor is irrelevant; the
    # dst/semaphore pair identifies the transfer).
    @pl.loop(0, tm)
    def _(r):
        pltpu.make_async_copy(
            table_hbm.at[pl.ds(0, 1)],
            buf_ref.at[pl.ds(r, 1)],
            sem_ref.at[r],
        ).wait()

    out_ref[...] = buf_ref[...]


def token_embedding(sentence, table, *, row_tile=128):
    """Pallas equivalent of TokenEmbedding.forward.

    sentence: (batch, seq) integer token indices
    table:    (vocab, feature) embedding weight
    returns:  (batch, seq, feature) == table[sentence]
    """
    B, S = sentence.shape
    V, F = table.shape
    R = B * S

    # Flatten and clamp ids (jnp.take-style clamping) so a bad id can never
    # produce an out-of-bounds DMA.
    ids = jnp.clip(sentence.astype(jnp.int32).reshape(R), 0, V - 1)

    # Row tile: as large as possible (<=128) while keeping sublane alignment.
    tm = min(row_tile, _round_up(R, 8))
    r_pad = _round_up(R, tm)
    if r_pad != R:
        ids = jnp.concatenate([ids, jnp.zeros((r_pad - R,), jnp.int32)])

    grid = (r_pad // tm,)
    itemsize = jnp.dtype(table.dtype).itemsize

    out = pl.pallas_call(
        functools.partial(_gather_rows_kernel, tm=tm),
        out_shape=jax.ShapeDtypeStruct((r_pad, F), table.dtype),
        grid_spec=pltpu.PrefetchScalarGridSpec(
            num_scalar_prefetch=1,                     # ids -> SMEM
            grid=grid,
            in_specs=[
                pl.BlockSpec(memory_space=pl.ANY),     # table stays in HBM
            ],
            out_specs=pl.BlockSpec((tm, F), lambda i, ids_smem: (i, 0)),
            scratch_shapes=[
                pltpu.VMEM((tm, F), table.dtype),      # gather landing buffer
                pltpu.SemaphoreType.DMA((tm,)),        # one sem per row DMA
            ],
        ),
        compiler_params=pltpu.CompilerParams(
            dimension_semantics=("parallel",),         # shard row tiles over TCs
        ),
        cost_estimate=pl.CostEstimate(
            flops=0,
            transcendentals=0,
            bytes_accessed=2 * R * F * itemsize + R * 4,
        ),
    )(ids, table)

    return out[:R].reshape(B, S, F)


if __name__ == "__main__":
    # Small shapes consistent with the module: batch=2, seq=8, vocab=32, feat=32
    batch, seq, vocab_size, feature_count = 2, 8, 32, 32

    key = jax.random.PRNGKey(0)
    k_idx, k_emb = jax.random.split(key)

    # Deterministic "parameters": nn.Embedding weight ~ N(0, 1), shape (V, F)
    embedding_table = jax.random.normal(
        k_emb, (vocab_size, feature_count), dtype=jnp.float32)
    # Deterministic input token indices, shape (batch, seq)
    sentence = jax.random.randint(
        k_idx, (batch, seq), 0, vocab_size, dtype=jnp.int32)

    out = token_embedding(sentence, embedding_table)
    out = jax.block_until_ready(out)

    # Reference: plain gather (what nn.Embedding does). DMA gather is bit-exact.
    ref = jnp.take(embedding_table, sentence, axis=0)
    assert out.shape == (batch, seq, feature_count), out.shape
    assert jnp.array_equal(out, ref), "mismatch vs reference gather"

    print("KERNEL_OK")
</pallas_src>

<mosaic_0001>
module attributes {stable_mosaic.version = 11 : i64} {
  func.func @_gather_rows_kernel(%arg0: i32, %arg1: memref<16xi32, #tpu.memory_space<smem>>, %arg2: memref<32x32xf32, #tpu.memory_space<any>>, %arg3: memref<16x32xf32, #tpu.memory_space<vmem>>, %arg4: memref<16x32xf32, #tpu.memory_space<vmem>>, %arg5: memref<16x!tpu.dma_semaphore, #tpu.memory_space<semaphore_mem>>) attributes {dimension_semantics = [#tpu.dimension_semantics<parallel>], iteration_bounds = array<i64: 1>, scalar_prefetch = 1 : i64, scratch_operands = 2 : i64, tpu.core_type = #tpu.core_type<tc>, window_params = [{}, {transform_indices = @transform_1, window_bounds = array<i64: 16, 32>}]} {
    %c16_i32 = arith.constant 16 : i32
    %0 = arith.muli %arg0, %c16_i32 : i32
    %c0_i32 = arith.constant 0 : i32
    %c16_i32_0 = arith.constant 16 : i32
    %1 = arith.addi %c0_i32, %c16_i32_0 : i32
    %c1_i32 = arith.constant 1 : i32
    scf.for %arg6 = %c0_i32 to %1 step %c1_i32  : i32 {
      %c1_i32_9 = arith.constant 1 : i32
      %5 = arith.muli %arg6, %c1_i32_9 : i32
      %c0_i32_10 = arith.constant 0 : i32
      %6 = arith.addi %c0_i32_10, %5 : i32
      %7 = arith.addi %0, %6 : i32
      %8 = arith.index_cast %7 : i32 to index
      %9 = memref.load %arg1[%8] : memref<16xi32, #tpu.memory_space<smem>>
      %c0_i32_11 = arith.constant 0 : i32
      %10 = tpu.memref_slice %arg2[%9, %c0_i32_11] : memref<32x32xf32, #tpu.memory_space<any>> -> memref<1x32xf32, #tpu.memory_space<any>>
      %c0_i32_12 = arith.constant 0 : i32
      %11 = tpu.memref_slice %arg4[%6, %c0_i32_12] : memref<16x32xf32, #tpu.memory_space<vmem>> -> memref<1x32xf32, #tpu.memory_space<vmem>>
      %12 = tpu.memref_slice %arg5[%6] : memref<16x!tpu.dma_semaphore, #tpu.memory_space<semaphore_mem>> -> memref<1x!tpu.dma_semaphore, #tpu.memory_space<semaphore_mem>>
      %13 = tpu.memref_squeeze %12 : memref<1x!tpu.dma_semaphore, #tpu.memory_space<semaphore_mem>> -> memref<!tpu.dma_semaphore, #tpu.memory_space<semaphore_mem>>
      tpu.enqueue_dma source(%10 : memref<1x32xf32, #tpu.memory_space<any>>) target(%11 : memref<1x32xf32, #tpu.memory_space<vmem>>) target_semaphore(%13 : memref<!tpu.dma_semaphore, #tpu.memory_space<semaphore_mem>>)
    }
    %c16_i32_1 = arith.constant 16 : i32
    %c0_i32_2 = arith.constant 0 : i32
    %c16_i32_3 = arith.constant 16 : i32
    %2 = arith.addi %c0_i32_2, %c16_i32_3 : i32
    %c1_i32_4 = arith.constant 1 : i32
    scf.for %arg6 = %c0_i32_2 to %2 step %c1_i32_4  : i32 {
      %c1_i32_9 = arith.constant 1 : i32
      %5 = arith.muli %arg6, %c1_i32_9 : i32
      %c0_i32_10 = arith.constant 0 : i32
      %6 = arith.addi %c0_i32_10, %5 : i32
      %c0_i32_11 = arith.constant 0 : i32
      %c0_i32_12 = arith.constant 0 : i32
      %7 = tpu.memref_slice %arg2[%c0_i32_11, %c0_i32_12] : memref<32x32xf32, #tpu.memory_space<any>> -> memref<1x32xf32, #tpu.memory_space<any>>
      %c0_i32_13 = arith.constant 0 : i32
      %8 = tpu.memref_slice %arg4[%6, %c0_i32_13] : memref<16x32xf32, #tpu.memory_space<vmem>> -> memref<1x32xf32, #tpu.memory_space<vmem>>
      %9 = tpu.memref_slice %arg5[%6] : memref<16x!tpu.dma_semaphore, #tpu.memory_space<semaphore_mem>> -> memref<1x!tpu.dma_semaphore, #tpu.memory_space<semaphore_mem>>
      %10 = tpu.memref_squeeze %9 : memref<1x!tpu.dma_semaphore, #tpu.memory_space<semaphore_mem>> -> memref<!tpu.dma_semaphore, #tpu.memory_space<semaphore_mem>>
      tpu.wait_dma2 semaphore(%10 : memref<!tpu.dma_semaphore, #tpu.memory_space<semaphore_mem>>) src(%7 : memref<1x32xf32, #tpu.memory_space<any>>) dst(%8 : memref<1x32xf32, #tpu.memory_space<vmem>>)
    }
    %c16_i32_5 = arith.constant 16 : i32
    %c0 = arith.constant 0 : index
    %c0_6 = arith.constant 0 : index
    %3 = vector.load %arg4[%c0, %c0_6] : memref<16x32xf32, #tpu.memory_space<vmem>>, vector<16x32xf32>
    %c0_7 = arith.constant 0 : index
    %c0_8 = arith.constant 0 : index
    %4 = vector.load %arg3[%c0_7, %c0_8] : memref<16x32xf32, #tpu.memory_space<vmem>>, vector<16x32xf32>
    tpu.vector_store %arg3[%c0_7, %c0_8], %3 {strides = array<i32>} : memref<16x32xf32, #tpu.memory_space<vmem>>, vector<16x32xf32>,
    return
  }
  func.func @transform_1(%arg0: i32, %arg1: memref<16xi32, #tpu.memory_space<smem>>) -> (i32, i32) {
    %c0_i32 = arith.constant 0 : i32
    %c0_i32_0 = arith.constant 0 : i32
    return %arg0, %c0_i32 : i32, i32
  }
}

</mosaic_0001>

<llo_original>
// kernel: tpu_custom_call.1
$region0: #{tpu_custom_call.1}
  #allocation0 [shape = 'u32[]', space=smem, size = 0x4, offset = 0x4, fixed_abs, tag = 'smem constant byte address 0x4 - core index']
  #allocation1 [shape = 'u32[144,128]{1,0:T(1,128)}', space=vmem, size = 0x12000, scoped, tag = 'internal scratch']
  #allocation2 [shape = 'f32[16,32]{1,0:T(8,128)}', space=vmem, size = 0x2000, scoped, tag = 'scratch operand']
  #allocation3 [shape = 's32[16]{0}', space=sflag, size = 0x40, scoped, tag = 'scratch operand']
  #allocation4 [shape = 's32[1]{0}', space=sflag, size = 0x4, scoped, tag = 'scoped memory for tpu_custom_call.1']
  #allocation5 [shape = 'u8[512]{0}', space=smem, size = 0x200, scoped, tag = 'prefetched SMEM operand 0']
  #allocation8 [shape = 's32[]', space=sflag, size = 0x4, offset = 0, fixed_abs, tag = 'sflag constant byte address 0x0 - dummy sync flag']
  #allocation9 [shape = 's32[]', space=sflag, size = 0x4, offset = 0, fixed_abs, tag = 'sflag constant byte address 0x0 - dummy sync flag']
  #allocation10 [shape = 'u32[]', space=smem, size = 0x4, offset = 0x44, fixed_abs, tag = 'smem constant byte address 0x44 - assertion arg 0']
  #allocation11 [shape = 'u32[]', space=smem, size = 0x4, offset = 0x48, fixed_abs, tag = 'smem constant byte address 0x48 - assertion arg 1']
  %s0 = inlined_call_operand.hbm [shape: s32[16], index: 0, kind: input, shape index: {}]
  %s1 = inlined_call_operand.hbm [shape: f32[32,32], index: 1, kind: input, shape index: {}]
  %s2 = inlined_call_operand.hbm [shape: f32[16,32], index: 2, kind: output, shape index: {}]
  %s3 = sld [smem:[#allocation0]]
  $region28: #{tpu_custom_call.1} parent=0
    _
  %s5 = ssub.s32 1, %s3
  %s6 = scalar_select 0, %s5, %s3
  %8 = dma.hbm_to_smem %s0, 16, [#allocation5], [#allocation4]
  %9 = dma.done [#allocation4], 16
  %10 = sfence
  $region1: #{tpu_custom_call.1} parent=0
    #allocation6 [shape = 'u8[8192]{0}', space=vmem, size = 0x2000, scoped, tag = 'output window, operand 0, single buffered']
    #allocation7 [shape = 's32[1]{0}', space=sflag, size = 0x4, scoped, tag = 'scoped memory for tpu_custom_call.1']
    %11 = vsyncpa [#allocation7], 0
    %s12 = smul.u32 0, 16
    loop: start=0, step=1, limit=16
    $region2: #{tpu_custom_call.1} parent=1 // loop_pre_header
      _
    $region3: #{tpu_custom_call.1} parent=1 // loop_header
      %s14 = sphi 0, %s18
      %p15 = scmp.ge.s32.totalorder %s14, 16
    $region4: #{tpu_custom_call.1} parent=1 // loop_header_branch
      %17 = sbr.rel (%p15) target = $region8
    $region5: #{tpu_custom_call.1} parent=1 // loop_body
      %s19 = sadd.s32 %s12, %s14
      %s20 = sld [smem:[#allocation5 + %s19]]
      %s21 = smul.addr %s20, 16
      %s22 = scalar_lea.hbm %s1, %s21
      %s23 = scalar_lea.vmem [#allocation2], %s14
      %s24 = scalar_lea.sflag [#allocation3], %s14
      // Predicated region
      $region9: #{tpu_custom_call.1} parent=5 // pred_check
        _
      $region10: #{tpu_custom_call.1} parent=5 // pred_check_branch
        %26 = sbr.rel target = $region12
      $region11: #{tpu_custom_call.1} parent=5 // pred_region
        %27 = sst [smem:[#allocation10]] [#allocation9]
        %28 = sst [smem:[#allocation11]] [#allocation8]
      $region12: #{tpu_custom_call.1} parent=5 // pred_fallthru
        _
      %30 = shalt.err (0)
      %s32 = sshll.u32 %s23, 4
      %s33 = int_to_ptr.vmem [resolvable:$true] %s32
      %35 = dma.hbm_to_vmem [thread:$0]  %s22, 16, %s33, %s24
    $region6: #{tpu_custom_call.1} parent=1 // loop_footer
      %s18 = sadd.s32 1, %s14
    $region7: #{tpu_custom_call.1} parent=1 // loop_footer_branch
      %13 = sbr.rel target = $region3
    $region8: #{tpu_custom_call.1} parent=1 // loop_exit
      _
    loop: start=0, step=1, limit=16
    $region13: #{tpu_custom_call.1} parent=1 // loop_pre_header
      _
    $region14: #{tpu_custom_call.1} parent=1 // loop_header
      %s37 = sphi 0, %s41
      %p38 = scmp.ge.s32.totalorder %s37, 16
    $region15: #{tpu_custom_call.1} parent=1 // loop_header_branch
      %40 = sbr.rel (%p38) target = $region19
    $region16: #{tpu_custom_call.1} parent=1 // loop_body
      %s42 = scalar_lea.sflag [#allocation3], %s37
      %s43 = smul.u32 1, 1
      %s44 = sshll.u32 %s43, 4
      %45 = dma.done %s42, %s44
    $region17: #{tpu_custom_call.1} parent=1 // loop_footer
      %s41 = sadd.s32 1, %s37
    $region18: #{tpu_custom_call.1} parent=1 // loop_footer_branch
      %36 = sbr.rel target = $region14
    $region19: #{tpu_custom_call.1} parent=1 // loop_exit
      _
    %v46 = vld [vmem:[#allocation2] sm:$0xff]
    %v47 = vld [vmem:[#allocation2 + $0x8] sm:$0xff]
    %vm48 = vcmask 261120
    %49 = vst.msk [vmem:[#allocation6] sm:$0xff] %vm48, %v46
    %50 = vst.msk [vmem:[#allocation6 + $0x8] sm:$0xff] %vm48, %v47
    // Predicated region
    $region20: #{tpu_custom_call.1} parent=1 // pred_check
      _
    $region21: #{tpu_custom_call.1} parent=1 // pred_check_branch
      %52 = sbr.rel (0) target = $region23
    $region22: #{tpu_custom_call.1} parent=1 // pred_region
      %s54 = ssub.s32 256, 256
      %55 = vsyncadd [#allocation7], %s54
      %s56 = sshll.u32 [#allocation6], 4
      %s57 = int_to_ptr.vmem [resolvable:$true] %s56
      %62 = dma.vmem_to_hbm [thread:$0]  %s57, 256, %s2, [#allocation7], 128, 128, 8
    $region23: #{tpu_custom_call.1} parent=1 // pred_fallthru
      _
    // Predicated region
    $region24: #{tpu_custom_call.1} parent=1 // pred_check
      _
    $region25: #{tpu_custom_call.1} parent=1 // pred_check_branch
      %64 = sbr.rel (0) target = $region27
    $region26: #{tpu_custom_call.1} parent=1 // pred_region
      %65 = dma.done [#allocation7], 256
    $region27: #{tpu_custom_call.1} parent=1 // pred_fallthru
      _
    %66 = vsyncpa [#allocation7], 1
  %67 = vsyncmov [#allocation3]
  %s68 = vpop.sfrf %67
  %p69 = scmp.eq.s32.totalorder %s68, 0
  %p70 = pneg %p69
  %72 = shalt.err (%p70)
  %s73 = scalar_lea.sflag [#allocation3], 1
  %74 = vsyncmov %s73
  %s75 = vpop.sfrf %74
  %p76 = scmp.eq.s32.totalorder %s75, 0
  %p77 = pneg %p76
  %79 = shalt.err (%p77)
  %s80 = scalar_lea.sflag [#allocation3], 2
  %81 = vsyncmov %s80
  %s82 = vpop.sfrf %81
  %p83 = scmp.eq.s32.totalorder %s82, 0
  %p84 = pneg %p83
  %86 = shalt.err (%p84)
  %s87 = scalar_lea.sflag [#allocation3], 3
  %88 = vsyncmov %s87
  %s89 = vpop.sfrf %88
  %p90 = scmp.eq.s32.totalorder %s89, 0
  %p91 = pneg %p90
  %93 = shalt.err (%p91)
  %s94 = scalar_lea.sflag [#allocation3], 4
  %95 = vsyncmov %s94
  %s96 = vpop.sfrf %95
  %p97 = scmp.eq.s32.totalorder %s96, 0
  %p98 = pneg %p97
  %100 = shalt.err (%p98)
  %s101 = scalar_lea.sflag [#allocation3], 5
  %102 = vsyncmov %s101
  %s103 = vpop.sfrf %102
  %p104 = scmp.eq.s32.totalorder %s103, 0
  %p105 = pneg %p104
  %107 = shalt.err (%p105)
  %s108 = scalar_lea.sflag [#allocation3], 6
  %109 = vsyncmov %s108
  %s110 = vpop.sfrf %109
  %p111 = scmp.eq.s32.totalorder %s110, 0
  %p112 = pneg %p111
  %114 = shalt.err (%p112)
  %s115 = scalar_lea.sflag [#allocation3], 7
  %116 = vsyncmov %s115
  %s117 = vpop.sfrf %116
  %p118 = scmp.eq.s32.totalorder %s117, 0
  %p119 = pneg %p118
  %121 = shalt.err (%p119)
  %s122 = scalar_lea.sflag [#allocation3], 8
  %123 = vsyncmov %s122
  %s124 = vpop.sfrf %123
  %p125 = scmp.eq.s32.totalorder %s124, 0
  %p126 = pneg %p125
  %128 = shalt.err (%p126)
  %s129 = scalar_lea.sflag [#allocation3], 9
  %130 = vsyncmov %s129
  %s131 = vpop.sfrf %130
  %p132 = scmp.eq.s32.totalorder %s131, 0
  %p133 = pneg %p132
  %135 = shalt.err (%p133)
  %s136 = scalar_lea.sflag [#allocation3], 10
  %137 = vsyncmov %s136
  %s138 = vpop.sfrf %137
  %p139 = scmp.eq.s32.totalorder %s138, 0
  %p140 = pneg %p139
  %142 = shalt.err (%p140)
  %s143 = scalar_lea.sflag [#allocation3], 11
  %144 = vsyncmov %s143
  %s145 = vpop.sfrf %144
  %p146 = scmp.eq.s32.totalorder %s145, 0
  %p147 = pneg %p146
  %149 = shalt.err (%p147)
  %s150 = scalar_lea.sflag [#allocation3], 12
  %151 = vsyncmov %s150
  %s152 = vpop.sfrf %151
  %p153 = scmp.eq.s32.totalorder %s152, 0
  %p154 = pneg %p153
  %156 = shalt.err (%p154)
  %s157 = scalar_lea.sflag [#allocation3], 13
  %158 = vsyncmov %s157
  %s159 = vpop.sfrf %158
  %p160 = scmp.eq.s32.totalorder %s159, 0
  %p161 = pneg %p160
  %163 = shalt.err (%p161)
  %s164 = scalar_lea.sflag [#allocation3], 14
  %165 = vsyncmov %s164
  %s166 = vpop.sfrf %165
  %p167 = scmp.eq.s32.totalorder %s166, 0
  %p168 = pneg %p167
  %170 = shalt.err (%p168)
  %s171 = scalar_lea.sflag [#allocation3], 15
  %172 = vsyncmov %s171
  %s173 = vpop.sfrf %172
  %p174 = scmp.eq.s32.totalorder %s173, 0
  %p175 = pneg %p174
  %177 = shalt.err (%p175)

</llo_original>
